<compile_context>
chip_gen: v7x
topology: tpu7x:2x2x1
jax: 0.10.0
libtpu: 0.0.40
codegen_flags: <defaults>
</compile_context>

<pallas_src>
import math

import jax
import jax.numpy as jnp
from jax.experimental import pallas as pl
from jax.experimental.pallas import tpu as pltpu

# ---------------- model dimensions (small, synthetic) -----------------------
LAT_C = 128       # latent channels  (padded to 128 lanes -> dense stores)
HID = 128         # hidden width of the tiny "UNet"
PROMPT_DIM = 32   # prompt-embedding dim (text-encoder stand-in)
TIME_DIM = 16     # sinusoidal timestep-embedding dim
T_TRAIN = 1000    # diffusion training horizon

# Safe everywhere: v5e/v6e have 128 MiB VMEM (scoped default 32), v7x only has
# 64 MiB per TensorCore — keep the explicit limit at 32 MiB and size tiles so
# the fused loop kernel stays ~12-16 MiB even at tm=2048.
VMEM_LIMIT = 32 * 1024 * 1024


def _pick_tile(m, cap=512):
    """Largest tile <= cap that is a multiple of 8 and divides m.

    The `return m` fallback only fires when no multiple-of-8 divisor exists;
    a block equal to the full dim is always a legal BlockSpec."""
    cand = [t for t in range(8, min(cap, m) + 1, 8) if m % t == 0]
    return max(cand) if cand else m


def _pick_row_tile(rows_per_image, total_rows, cap=2048):
    """Row tile for the fused denoise loop.

    - divides rows_per_image so every tile lies inside one batch image
      (lets the per-image prompt row be selected purely by index_map),
    - multiple of 8 (sublane aligned),
    - as large as possible (grid-step overhead ~0.35us; longer MXU M),
    - if only one row tile would remain, halve it so v7x's two TensorCores
      both get work on the "parallel" axis.
    """
    tm = _pick_tile(rows_per_image, cap)
    while (total_rows // tm < 2 and tm >= 16 and (tm // 2) % 8 == 0
           and rows_per_image % (tm // 2) == 0):
        tm //= 2
    return tm


# =====================================================================
# Kernel 1: create_control (canny branch) — grayscale + gradient edges
#   grid = (B, H_tiles); exact gy across tile boundaries via the previous
#   tile's last row; border gradients masked (pltpu.roll is circular);
#   threshold on mag^2 (no sqrt).
# =====================================================================
def _control_kernel(img_ref, up_ref, o_ref):
    h = pl.program_id(1)
    th = img_ref.shape[2]
    img = img_ref[...]                                       # (1, 3, th, W)
    gray = (0.299 * img[:, 0] + 0.587 * img[:, 1]
            + 0.114 * img[:, 2])                             # (1, th, W)
    up_last = up_ref[:, :, th - 1:th, :]                     # (1, 3, 1, W)
    prev = (0.299 * up_last[:, 0] + 0.587 * up_last[:, 1]
            + 0.114 * up_last[:, 2])                         # (1, 1, W)
    gx = gray - pltpu.roll(gray, shift=1, axis=2)            # lane shift
    gy = gray - pltpu.roll(gray, shift=1, axis=1)            # sublane shift
    col = jax.lax.broadcasted_iota(jnp.int32, gray.shape, 2)
    row = jax.lax.broadcasted_iota(jnp.int32, gray.shape, 1)
    gx = jnp.where(col > 0, gx, 0.0)                         # kill circular wrap
    gy = jnp.where(row == 0, gray - prev, gy)                # cross-tile row
    gy = jnp.where(jnp.logical_and(row == 0, h == 0), 0.0, gy)  # global row 0
    mag2 = gx * gx + gy * gy
    o_ref[...] = jnp.where(mag2 > 0.01, 1.0, 0.0).astype(o_ref.dtype)


def canny_control(img_nchw):
    B, C, H, W = img_nchw.shape
    th = _pick_tile(H, cap=128)
    return pl.pallas_call(
        _control_kernel,
        out_shape=jax.ShapeDtypeStruct((B, H, W), jnp.float32),
        grid=(B, H // th),
        in_specs=[
            pl.BlockSpec((1, C, th, W), lambda b, h: (b, 0, h, 0)),
            # previous H-tile (clamped at 0) supplies the row just above the
            # tile so gy is exact across tile boundaries.
            pl.BlockSpec((1, C, th, W),
                         lambda b, h: (b, 0, jnp.maximum(h - 1, 0), 0)),
        ],
        out_specs=pl.BlockSpec((1, th, W), lambda b, h: (b, h, 0)),
        compiler_params=pltpu.CompilerParams(
            dimension_semantics=("parallel", "parallel"),
            vmem_limit_bytes=VMEM_LIMIT),
    )(img_nchw, img_nchw)


# =====================================================================
# Kernel 2: channel projection — kept ONLY for the degenerate path where
#   strength truncates the schedule to zero denoising steps.
#   Tiny contraction dims (K <= 8) use VPU FMAs instead of the MXU.
# =====================================================================
def _channel_proj_kernel(x_ref, w_ref, b_ref, o_ref):
    cin = x_ref.shape[1]
    if cin <= 8:
        y = x_ref[:, 0:1] * w_ref[0:1, :]
        for c in range(1, cin):
            y = y + x_ref[:, c:c + 1] * w_ref[c:c + 1, :]
    else:
        y = jnp.dot(x_ref[...].astype(jnp.bfloat16),
                    w_ref[...].astype(jnp.bfloat16),
                    preferred_element_type=jnp.float32)
    o_ref[...] = (y + b_ref[...]).astype(o_ref.dtype)


def channel_proj(x, w, b):
    M, Cin = x.shape
    Cout = w.shape[1]
    tm = _pick_tile(M, cap=2048)
    return pl.pallas_call(
        _channel_proj_kernel,
        out_shape=jax.ShapeDtypeStruct((M, Cout), jnp.float32),
        grid=(M // tm,),
        in_specs=[pl.BlockSpec((tm, Cin), lambda m: (m, 0)),
                  pl.BlockSpec((Cin, Cout), lambda m: (0, 0)),
                  pl.BlockSpec((1, Cout), lambda m: (0, 0))],
        out_specs=pl.BlockSpec((tm, Cout), lambda m: (m, 0)),
        compiler_params=pltpu.CompilerParams(
            dimension_semantics=("parallel",),
            vmem_limit_bytes=VMEM_LIMIT),
    )(x, w, b)


# =====================================================================
# Kernel 3: fully fused img2img kernel (encode + DDIM loop + decode)
#   grid = (row_tiles, n_steps), semantics = ("parallel", "arbitrary")
#   - latent lives in a VMEM scratch (never written to / read from HBM)
#   - t==0:   VAE-encode stand-in (VPU FMAs, K=3) + noise add
#   - per-t:  rank-1 bias recombine, w1/w2 bf16 MXU matmuls, SiLU, CFG,
#             fused DDIM update (two FMAs, coeffs from flat SMEM vector)
#   - t==last: VAE-decode projection + clip -> only HBM write of the loop
# =====================================================================
def _denoise_fused_kernel(coef_ref, img_ref, noise_ref, ctrl_ref, phc_ref,
                          wc_ref, b1_ref, sb_ref, w1_ref, w2_ref, b2_ref,
                          wenc_ref, benc_ref, wdec_ref, bdec_ref,
                          rgb_ref, x_scr):
    t = pl.program_id(1)
    n_steps = pl.num_programs(1)

    # ---- step 0: fused VAE-encode stand-in + noise add ---------------------
    @pl.when(t == 0)
    def _init():
        img = img_ref[...]                                    # (tm, 3)
        lat = (img[:, 0:1] * wenc_ref[0:1, :]
               + img[:, 1:2] * wenc_ref[1:2, :]
               + img[:, 2:3] * wenc_ref[2:3, :]
               + benc_ref[...])                               # (tm, C)
        x_scr[...] = coef_ref[0] * lat + coef_ref[1] * noise_ref[...]

    # ---- step-invariant biases recombined from rank-1 factors (VPU slack) --
    bias_u = ctrl_ref[...] * wc_ref[...] + b1_ref[...]        # (tm, HID)
    bias_c = bias_u + phc_ref[0]                              # + per-image prompt

    x = x_scr[...]                                            # (tm, C) f32

    # shared trunk: latent proj + per-step time-embedding bias (VMEM resident)
    base = jnp.dot(x.astype(jnp.bfloat16), w1_ref[...],
                   preferred_element_type=jnp.float32)        # (tm, HID)
    base = base + sb_ref[t]                                   # (1, HID) bcast

    # CFG branches: two dots sharing the loaded w2 (no (2*tm,HID) concat copy)
    h_c = base + bias_c
    h_u = base + bias_u
    h_c = h_c * jax.nn.sigmoid(h_c)                           # SiLU (EUP)
    h_u = h_u * jax.nn.sigmoid(h_u)
    eps_c = jnp.dot(h_c.astype(jnp.bfloat16), w2_ref[...],
                    preferred_element_type=jnp.float32)       # (tm, C)
    eps_u = jnp.dot(h_u.astype(jnp.bfloat16), w2_ref[...],
                    preferred_element_type=jnp.float32)

    g = coef_ref[2]                                           # guidance scale
    c1 = coef_ref[3 + 2 * t]                                  # sa_p / sa_t
    c2 = coef_ref[4 + 2 * t]                                  # s1a_p - sa_p*s1a_t/sa_t
    eps = eps_u + g * (eps_c - eps_u) + b2_ref[...]           # CFG + out bias
    x_new = c1 * x + c2 * eps                                 # DDIM as 2 FMAs
    x_scr[...] = x_new

    # ---- last step: fused VAE-decode epilogue (latent never hits HBM) ------
    @pl.when(t == n_steps - 1)
    def _decode():
        rgb = jnp.dot(x_new.astype(jnp.bfloat16), wdec_ref[...],
                      preferred_element_type=jnp.float32) + bdec_ref[...]
        rgb_ref[...] = jnp.clip(rgb, 0.0, 1.0).astype(rgb_ref.dtype)


def denoise_pipeline(coef, img_ds, noise, ctrl_ds, ph_c, step_bias, params,
                     rows_per_image):
    M, C = noise.shape
    n_steps, _, Hd = step_bias.shape
    tm = _pick_row_tile(rows_per_image, M)
    tiles_per_image = rows_per_image // tm
    return pl.pallas_call(
        _denoise_fused_kernel,
        out_shape=jax.ShapeDtypeStruct((M, 3), jnp.float32),
        grid=(M // tm, n_steps),
        in_specs=[
            # flat DDIM coefficient vector: [sa0, s1a0, g, (c1, c2)*n_steps]
            pl.BlockSpec(memory_space=pltpu.MemorySpace.SMEM),
            pl.BlockSpec((tm, 3), lambda m, t: (m, 0)),               # img_ds
            pl.BlockSpec((tm, C), lambda m, t: (m, 0)),               # noise
            pl.BlockSpec((tm, 1), lambda m, t: (m, 0)),               # ctrl_ds
            pl.BlockSpec((1, 1, Hd),                                  # ph_c row
                         lambda m, t: (m // tiles_per_image, 0, 0)),
            pl.BlockSpec((1, Hd), lambda m, t: (0, 0)),               # wc
            pl.BlockSpec((1, Hd), lambda m, t: (0, 0)),               # b1
            pl.BlockSpec((n_steps, 1, Hd), lambda m, t: (0, 0, 0)),   # step_bias
            pl.BlockSpec((C, Hd), lambda m, t: (0, 0)),               # w1 (bf16)
            pl.BlockSpec((Hd, C), lambda m, t: (0, 0)),               # w2 (bf16)
            pl.BlockSpec((1, C), lambda m, t: (0, 0)),                # b2
            pl.BlockSpec((3, C), lambda m, t: (0, 0)),                # w_enc
            pl.BlockSpec((1, C), lambda m, t: (0, 0)),                # b_enc
            pl.BlockSpec((C, 3), lambda m, t: (0, 0)),                # w_dec (bf16)
            pl.BlockSpec((1, 3), lambda m, t: (0, 0)),                # b_dec
        ],
        out_specs=pl.BlockSpec((tm, 3), lambda m, t: (m, 0)),
        scratch_shapes=[pltpu.VMEM((tm, C), jnp.float32)],            # latent
        compiler_params=pltpu.CompilerParams(
            dimension_semantics=("parallel", "arbitrary"),
            vmem_limit_bytes=VMEM_LIMIT),
    )(coef, img_ds, noise, ctrl_ds, ph_c,
      params["wc"], params["b1"], step_bias,
      params["w1"].astype(jnp.bfloat16), params["w2"].astype(jnp.bfloat16),
      params["b2"], params["w_enc"], params["b_enc"],
      params["w_dec"].astype(jnp.bfloat16), params["b_dec"])


# ---------------------------- glue / setup ----------------------------------
def alpha_bar(t):
    # cosine schedule (host-side python math -> compile-time constants)
    return math.cos((t / T_TRAIN + 0.008) / 1.008 * math.pi / 2.0) ** 2


def timestep_embedding(t, dim):
    half = dim // 2
    freqs = jnp.exp(-math.log(10000.0)
                    * jnp.arange(half, dtype=jnp.float32) / half)
    ang = float(t) * freqs
    return jnp.concatenate([jnp.sin(ang), jnp.cos(ang)])[None, :]   # (1, dim)


def init_params(key):
    ks = jax.random.split(key, 8)
    n = lambda k, shape, s=0.1: jax.random.normal(k, shape, jnp.float32) * s
    return dict(
        w_desc=n(ks[0], (3, PROMPT_DIM)),                 # description_model stand-in
        w_enc=n(ks[1], (3, LAT_C), 0.5),                  # VAE encoder stand-in
        b_enc=jnp.zeros((1, LAT_C), jnp.float32),
        w_dec=n(ks[2], (LAT_C, 3), 0.2),                  # VAE decoder stand-in
        b_dec=jnp.full((1, 3), 0.5, jnp.float32),
        w1=n(ks[3], (LAT_C, HID)),                        # tiny UNet
        wp=n(ks[4], (PROMPT_DIM, HID)),
        wc=n(ks[5], (1, HID)),
        wt=n(ks[6], (TIME_DIM, HID)),
        b1=jnp.zeros((1, HID), jnp.float32),
        w2=n(ks[7], (HID, LAT_C)),
        b2=jnp.zeros((1, LAT_C), jnp.float32),
    )


def pixar_generator_forward(image_nchw, prompt_embed, params, *, noise_key,
                            strength=0.6, num_inference_steps=25,
                            guidance_scale=8.0):
    """Mirrors PixarGenerator.forward: control -> prompt -> img2img diffusion."""
    B, _, H, W = image_nchw.shape
    img_nchw = image_nchw.astype(jnp.float32)

    # --- create_control (canny branch), Pallas stencil kernel ---------------
    control = canny_control(img_nchw)                              # (B, H, W)

    # --- description_model + text encoder stand-in (tiny glue) --------------
    # prompt = description_model(image) + prompt ;  negative_prompt = ''
    img_nhwc = jnp.transpose(img_nchw, (0, 2, 3, 1))
    pooled = jnp.mean(img_nhwc, axis=(1, 2))                       # (B, 3)
    pe_c = pooled @ params["w_desc"] + prompt_embed[None, :]       # (B, Dp)
    # NOTE: the unconditional branch's prompt embedding is exactly zero, so
    # its wp term vanishes; if a real negative prompt is wired in, add it back.
    ph_c = (pe_c @ params["wp"]).reshape(B, 1, HID)                # (B, 1, HID)

    # --- 2x2 avg pool down-sampling (XLA) + per-row control column ----------
    Hl, Wl = H // 2, W // 2
    S = Hl * Wl
    M = B * S
    img_ds = img_nhwc.reshape(B, Hl, 2, Wl, 2, 3).mean(axis=(2, 4)).reshape(M, 3)
    ctrl_ds = control.reshape(B, Hl, 2, Wl, 2).mean(axis=(2, 4)).reshape(M, 1)

    # --- img2img timestep schedule (diffusers-style strength truncation) ----
    steps = num_inference_steps
    all_ts = [int(T_TRAIN - (i + 0.5) * T_TRAIN / steps) for i in range(steps)]
    init_t = min(int(steps * strength), steps)
    ts = all_ts[steps - init_t:]

    if len(ts) > 0:
        ab0 = alpha_bar(ts[0])
        noise = jax.random.normal(noise_key, (M, LAT_C), jnp.float32)

        # flat fused-coefficient vector (SMEM): [sa0, s1a0, g, (c1,c2)*steps]
        cvals = [math.sqrt(ab0), math.sqrt(1.0 - ab0), guidance_scale]
        for i, t in enumerate(ts):
            t_prev = ts[i + 1] if i + 1 < len(ts) else 0
            ab_t, ab_p = alpha_bar(t), alpha_bar(t_prev)
            sa_t, s1a_t = math.sqrt(ab_t), math.sqrt(1.0 - ab_t)
            sa_p, s1a_p = math.sqrt(ab_p), math.sqrt(1.0 - ab_p)
            cvals += [sa_p / sa_t, s1a_p - sa_p * s1a_t / sa_t]
        coef = jnp.array(cvals, dtype=jnp.float32)

        # per-step time-embedding bias, whole-array VMEM resident in kernel
        temb = jnp.concatenate([timestep_embedding(t, TIME_DIM) for t in ts],
                               axis=0)                             # (n_steps, Dt)
        step_bias = (temb @ params["wt"]).reshape(len(ts), 1, HID)

        # --- single fused kernel: encode -> DDIM loop -> decode -------------
        rgb = denoise_pipeline(coef, img_ds, noise, ctrl_ds, ph_c, step_bias,
                               params, S)                          # (M, 3)
    else:
        # degenerate fallback: strength truncates the schedule to zero steps
        lat = channel_proj(img_ds, params["w_enc"], params["b_enc"])
        rgb = channel_proj(lat, params["w_dec"], params["b_dec"])
        rgb = jnp.clip(rgb, 0.0, 1.0)

    # --- 2x nearest-neighbour upsample back to input resolution (XLA) -------
    rgb = rgb.reshape(B, Hl, Wl, 3)
    rgb = jnp.repeat(jnp.repeat(rgb, 2, axis=1), 2, axis=2)
    return jnp.transpose(rgb, (0, 3, 1, 2))                        # NCHW


if __name__ == "__main__":
    key = jax.random.PRNGKey(0)
    k_img, k_par, k_prm, k_noise = jax.random.split(key, 4)

    B, Cimg, H, W = 2, 3, 16, 16
    image = jax.random.uniform(k_img, (B, Cimg, H, W), dtype=jnp.float32)
    params = init_params(k_par)
    prompt_embed = jax.random.normal(k_prm, (PROMPT_DIM,), jnp.float32) * 0.1

    out = pixar_generator_forward(image, prompt_embed, params,
                                  noise_key=k_noise,
                                  strength=0.5, num_inference_steps=6,
                                  guidance_scale=8.0)
    out = jax.block_until_ready(out)
    assert out.shape == (B, Cimg, H, W), out.shape
    assert bool(jnp.all(jnp.isfinite(out)))
    print("KERNEL_OK")
</pallas_src>

<mosaic_0001>
module attributes {stable_mosaic.version = 11 : i64} {
  func.func @_control_kernel(%arg0: i32, %arg1: i32, %arg2: memref<1x3x16x16xf32, #tpu.memory_space<vmem>>, %arg3: memref<1x3x16x16xf32, #tpu.memory_space<vmem>>, %arg4: memref<1x16x16xf32, #tpu.memory_space<vmem>>) attributes {dimension_semantics = [#tpu.dimension_semantics<parallel>, #tpu.dimension_semantics<parallel>], iteration_bounds = array<i64: 2, 1>, scalar_prefetch = 0 : i64, scratch_operands = 0 : i64, tpu.core_type = #tpu.core_type<tc>, window_params = [{transform_indices = @transform_0, window_bounds = array<i64: 1, 3, 16, 16>}, {transform_indices = @transform_1, window_bounds = array<i64: 1, 3, 16, 16>}, {transform_indices = @transform_2, window_bounds = array<i64: 1, 16, 16>}]} {
    %c0 = arith.constant 0 : index
    %c0_0 = arith.constant 0 : index
    %c0_1 = arith.constant 0 : index
    %c0_2 = arith.constant 0 : index
    %0 = vector.load %arg2[%c0, %c0_0, %c0_1, %c0_2] : memref<1x3x16x16xf32, #tpu.memory_space<vmem>>, vector<1x3x16x16xf32>
    %1 = vector.extract_strided_slice %0 {offsets = [0, 0, 0, 0], sizes = [1, 1, 16, 16], strides = [1, 1, 1, 1]} : vector<1x3x16x16xf32> to vector<1x1x16x16xf32>
    %2 = vector.shape_cast %1 : vector<1x1x16x16xf32> to vector<1x16x16xf32>
    %cst = arith.constant 2.990000e-01 : f32
    %3 = vector.broadcast %cst : f32 to vector<1x16x16xf32>
    %4 = arith.mulf %3, %2 : vector<1x16x16xf32>
    %5 = vector.extract_strided_slice %0 {offsets = [0, 1, 0, 0], sizes = [1, 1, 16, 16], strides = [1, 1, 1, 1]} : vector<1x3x16x16xf32> to vector<1x1x16x16xf32>
    %6 = vector.shape_cast %5 : vector<1x1x16x16xf32> to vector<1x16x16xf32>
    %cst_3 = arith.constant 5.870000e-01 : f32
    %7 = vector.broadcast %cst_3 : f32 to vector<1x16x16xf32>
    %8 = arith.mulf %7, %6 : vector<1x16x16xf32>
    %9 = arith.addf %4, %8 : vector<1x16x16xf32>
    %10 = vector.extract_strided_slice %0 {offsets = [0, 2, 0, 0], sizes = [1, 1, 16, 16], strides = [1, 1, 1, 1]} : vector<1x3x16x16xf32> to vector<1x1x16x16xf32>
    %11 = vector.shape_cast %10 : vector<1x1x16x16xf32> to vector<1x16x16xf32>
    %cst_4 = arith.constant 1.140000e-01 : f32
    %12 = vector.broadcast %cst_4 : f32 to vector<1x16x16xf32>
    %13 = arith.mulf %12, %11 : vector<1x16x16xf32>
    %14 = arith.addf %9, %13 : vector<1x16x16xf32>
    %c0_5 = arith.constant 0 : index
    %c0_6 = arith.constant 0 : index
    %c15 = arith.constant 15 : index
    %c0_7 = arith.constant 0 : index
    %15 = vector.load %arg3[%c0_5, %c0_6, %c15, %c0_7] : memref<1x3x16x16xf32, #tpu.memory_space<vmem>>, vector<1x3x1x16xf32>
    %16 = vector.extract_strided_slice %15 {offsets = [0, 0, 0, 0], sizes = [1, 1, 1, 16], strides = [1, 1, 1, 1]} : vector<1x3x1x16xf32> to vector<1x1x1x16xf32>
    %17 = vector.shape_cast %16 : vector<1x1x1x16xf32> to vector<1x1x16xf32>
    %cst_8 = arith.constant 2.990000e-01 : f32
    %18 = vector.broadcast %cst_8 : f32 to vector<1x1x16xf32>
    %19 = arith.mulf %18, %17 : vector<1x1x16xf32>
    %20 = vector.extract_strided_slice %15 {offsets = [0, 1, 0, 0], sizes = [1, 1, 1, 16], strides = [1, 1, 1, 1]} : vector<1x3x1x16xf32> to vector<1x1x1x16xf32>
    %21 = vector.shape_cast %20 : vector<1x1x1x16xf32> to vector<1x1x16xf32>
    %cst_9 = arith.constant 5.870000e-01 : f32
    %22 = vector.broadcast %cst_9 : f32 to vector<1x1x16xf32>
    %23 = arith.mulf %22, %21 : vector<1x1x16xf32>
    %24 = arith.addf %19, %23 : vector<1x1x16xf32>
    %25 = vector.extract_strided_slice %15 {offsets = [0, 2, 0, 0], sizes = [1, 1, 1, 16], strides = [1, 1, 1, 1]} : vector<1x3x1x16xf32> to vector<1x1x1x16xf32>
    %26 = vector.shape_cast %25 : vector<1x1x1x16xf32> to vector<1x1x16xf32>
    %cst_10 = arith.constant 1.140000e-01 : f32
    %27 = vector.broadcast %cst_10 : f32 to vector<1x1x16xf32>
    %28 = arith.mulf %27, %26 : vector<1x1x16xf32>
    %29 = arith.addf %24, %28 : vector<1x1x16xf32>
    %c1_i32 = arith.constant 1 : i32
    %30 = tpu.dynamic_rotate %14 by %c1_i32 dim 2 : vector<1x16x16xf32>, i32 -> vector<1x16x16xf32>
    %31 = arith.subf %14, %30 : vector<1x16x16xf32>
    %c1_i32_11 = arith.constant 1 : i32
    %32 = tpu.dynamic_rotate %14 by %c1_i32_11 dim 1 : vector<1x16x16xf32>, i32 -> vector<1x16x16xf32>
    %33 = arith.subf %14, %32 : vector<1x16x16xf32>
    %34 = tpu.iota {dimensions = array<i32: 2>} : vector<1x16x16xi32>
    %35 = tpu.iota {dimensions = array<i32: 1>} : vector<1x16x16xi32>
    %c0_i32 = arith.constant 0 : i32
    %36 = vector.broadcast %c0_i32 : i32 to vector<1x16x16xi32>
    %37 = arith.cmpi sgt, %34, %36 : vector<1x16x16xi32>
    %cst_12 = arith.constant 0.000000e+00 : f32
    %38 = vector.broadcast %cst_12 : f32 to vector<1x16x16xf32>
    %39 = arith.select %37, %31, %38 : vector<1x16x16xi1>, vector<1x16x16xf32>
    %c0_i32_13 = arith.constant 0 : i32
    %40 = vector.broadcast %c0_i32_13 : i32 to vector<1x16x16xi32>
    %41 = arith.cmpi eq, %35, %40 : vector<1x16x16xi32>
    %42 = vector.broadcast %29 : vector<1x1x16xf32> to vector<1x16x16xf32>
    %43 = arith.subf %14, %42 : vector<1x16x16xf32>
    %44 = arith.select %41, %43, %33 : vector<1x16x16xi1>, vector<1x16x16xf32>
    %c0_i32_14 = arith.constant 0 : i32
    %45 = vector.broadcast %c0_i32_14 : i32 to vector<1x16x16xi32>
    %46 = arith.cmpi eq, %35, %45 : vector<1x16x16xi32>
    %c0_i32_15 = arith.constant 0 : i32
    %47 = arith.cmpi eq, %arg1, %c0_i32_15 : i32
    %48 = vector.broadcast %47 : i1 to vector<1x16x16xi1>
    %49 = arith.andi %46, %48 : vector<1x16x16xi1>
    %cst_16 = arith.constant 0.000000e+00 : f32
    %50 = vector.broadcast %cst_16 : f32 to vector<1x16x16xf32>
    %51 = arith.select %49, %50, %44 : vector<1x16x16xi1>, vector<1x16x16xf32>
    %52 = arith.mulf %39, %39 : vector<1x16x16xf32>
    %53 = arith.mulf %51, %51 : vector<1x16x16xf32>
    %54 = arith.addf %52, %53 : vector<1x16x16xf32>
    %cst_17 = arith.constant 0.00999999977 : f32
    %55 = vector.broadcast %cst_17 : f32 to vector<1x16x16xf32>
    %56 = arith.cmpf ogt, %54, %55 : vector<1x16x16xf32>
    %cst_18 = arith.constant 1.000000e+00 : f32
    %cst_19 = arith.constant 0.000000e+00 : f32
    %57 = vector.broadcast %cst_18 : f32 to vector<1x16x16xf32>
    %58 = vector.broadcast %cst_19 : f32 to vector<1x16x16xf32>
    %59 = arith.select %56, %57, %58 : vector<1x16x16xi1>, vector<1x16x16xf32>
    %c0_20 = arith.constant 0 : index
    %c0_21 = arith.constant 0 : index
    %c0_22 = arith.constant 0 : index
    %60 = vector.load %arg4[%c0_20, %c0_21, %c0_22] : memref<1x16x16xf32, #tpu.memory_space<vmem>>, vector<1x16x16xf32>
    tpu.vector_store %arg4[%c0_20, %c0_21, %c0_22], %59 {strides = array<i32>} : memref<1x16x16xf32, #tpu.memory_space<vmem>>, vector<1x16x16xf32>,
    return
  }
  func.func @transform_0(%arg0: i32, %arg1: i32) -> (i32, i32, i32, i32) {
    %c0_i32 = arith.constant 0 : i32
    %c0_i32_0 = arith.constant 0 : i32
    %c0_i32_1 = arith.constant 0 : i32
    return %arg0, %c0_i32, %arg1, %c0_i32_0 : i32, i32, i32, i32
  }
  func.func @transform_1(%arg0: i32, %arg1: i32) -> (i32, i32, i32, i32) {
    %c1_i32 = arith.constant 1 : i32
    %0 = arith.subi %arg1, %c1_i32 : i32
    %c0_i32 = arith.constant 0 : i32
    %1 = arith.maxsi %0, %c0_i32 : i32
    %c0_i32_0 = arith.constant 0 : i32
    %c0_i32_1 = arith.constant 0 : i32
    %c0_i32_2 = arith.constant 0 : i32
    return %arg0, %c0_i32_0, %1, %c0_i32_1 : i32, i32, i32, i32
  }
  func.func @transform_2(%arg0: i32, %arg1: i32) -> (i32, i32, i32) {
    %c0_i32 = arith.constant 0 : i32
    %c0_i32_0 = arith.constant 0 : i32
    return %arg0, %arg1, %c0_i32 : i32, i32, i32
  }
}

</mosaic_0001>

<llo_original>
// kernel: tpu_custom_call.1
$region0: #{tpu_custom_call.1}
  #allocation0 [shape = 'u32[]', space=smem, size = 0x4, offset = 0x4, fixed_abs, tag = 'smem constant byte address 0x4 - core index']
  #allocation1 [shape = 'u32[144,128]{1,0:T(1,128)}', space=vmem, size = 0x12000, scoped, tag = 'internal scratch']
  %s0 = inlined_call_operand.hbm [shape: f32[2,3,16,16], index: 0, kind: input, shape index: {}]
  %s1 = inlined_call_operand.hbm [shape: f32[2,3,16,16], index: 1, kind: input, shape index: {}]
  %s2 = inlined_call_operand.hbm [shape: f32[2,16,16], index: 2, kind: output, shape index: {}]
  %s3 = sld [smem:[#allocation0]]
  $region49: #{tpu_custom_call.1} parent=0
    _
  %s5 = ssub.s32 1, %s3
  %s6 = scalar_select 0, %s5, %s3
  $region1: #{tpu_custom_call.1} parent=0
    #allocation2 [shape = 'u8[49152]{0}', space=vmem, size = 0xc000, scoped, tag = 'input window, operand 0']
    #allocation3 [shape = 's32[2]{0}', space=sflag, size = 0x8, scoped, tag = 'scoped memory for tpu_custom_call.1']
    #allocation4 [shape = 's32[2]{0}', space=sflag, size = 0x8, scoped, tag = 'scoped memory for tpu_custom_call.1']
    #allocation5 [shape = 'u8[49152]{0}', space=vmem, size = 0xc000, scoped, tag = 'input window, operand 1']
    #allocation6 [shape = 's32[2]{0}', space=sflag, size = 0x8, scoped, tag = 'scoped memory for tpu_custom_call.1']
    #allocation7 [shape = 'u8[16384]{0}', space=vmem, size = 0x4000, scoped, tag = 'output window, operand 0']
    %7 = vsyncpa [#allocation3], 0
    %s8 = scalar_lea.sflag [#allocation3], 1
    %9 = vsyncpa %s8, 0
    %10 = vsyncpa [#allocation6], 0
    %s11 = scalar_lea.sflag [#allocation6], 1
    %12 = vsyncpa %s11, 0
    %13 = vsyncpa [#allocation4], 0
    %s14 = scalar_lea.sflag [#allocation4], 1
    %15 = vsyncpa %s14, 0
    loop: start=0, step=1, limit=4
    $region2: #{tpu_custom_call.1} parent=1 // loop_pre_header
      _
    $region3: #{tpu_custom_call.1} parent=1 // loop_header
      %s17 = sphi 0, %s21
      %p18 = scmp.ge.s32.totalorder %s17, 4
      %s24 = sphi 0, %s36
      %s25 = sphi 0, %s32
      %s26 = sphi 0, %s24
      %s27 = sphi 0, %s25
      %s28 = sphi 0, %s26
      %s29 = sphi 0, %s27
      %s41 = sphi 0, %s43
      %s44 = sphi 0, %s41
      %s45 = sphi 0, %s44
      %s61 = sphi 0, %s45
      %s75 = sphi 0, %s77
      %s78 = sphi 0, %s75
      %s79 = sphi 0, %s78
      %s95 = sphi 0, %s79
      %s103 = sphi 0, %s105
      %s106 = sphi 0, %s103
      %s107 = sphi 0, %s106
      %s123 = sphi 0, %s107
    $region4: #{tpu_custom_call.1} parent=1 // loop_header_branch
      %20 = sbr.rel (%p18) target = $region8
    $region5: #{tpu_custom_call.1} parent=1 // loop_body
      %s22 = ssub.s32 %s17, 1
      %s23 = ssub.s32 %s17, 2
      %s30 = sadd.s32 1, %s25
      %p31 = scmp.ge.s32.totalorder %s30, 1
      %s32 = scalar_select %p31, 0, %s30
      %s33 = sadd.s32 1, %s24
      %s34 = scalar_select %p31, %s33, %s24
      %p35 = scmp.ge.s32.totalorder %s34, 2
      %s36 = scalar_select %p35, 0, %s34
      %s37 = ssub.s32 %s24, %s36
      %s38 = ssub.s32 %s25, %s32
      %s39 = sor.u32 %s37, %s38
      %p40 = scmp.eq.s32.totalorder %s39, 0
      %s42 = sadd.s32 %s41, 1
      %s43 = scalar_select %p40, %s41, %s42
      %p46 = pneg %p40
      %p47 = scmp.eq.s32.totalorder %s17, 1
      %p48 = por %p46, %p47
      %p49 = scmp.ne.s32.totalorder %s41, %s44
      %p50 = scmp.eq.s32.totalorder %s17, 0
      %p51 = por %p49, %p50
      %p52 = scmp.ne.s32.totalorder %s41, %s44
      %p53 = scmp.eq.s32.totalorder %s22, 1
      %p54 = por %p52, %p53
      %p55 = scmp.ne.s32.totalorder %s44, %s45
      %p56 = scmp.eq.s32.totalorder %s22, 0
      %p57 = por %p55, %p56
      %p58 = scmp.ne.s32.totalorder %s44, %s45
      %p59 = scmp.eq.s32.totalorder %s23, 1
      %p60 = por %p58, %p59
      %p62 = scmp.ne.s32.totalorder %s45, %s61
      %p63 = scmp.eq.s32.totalorder %s23, 0
      %p64 = por %p62, %p63
      %s65 = ssub.s32 %s25, 1
      %p66 = scmp.gt.s32.totalorder %s65, 0
      %s67 = scalar_select %p66, %s65, 0
      %s68 = ssub.s32 %s32, 1
      %p69 = scmp.gt.s32.totalorder %s68, 0
      %s70 = scalar_select %p69, %s68, 0
      %s71 = ssub.s32 %s24, %s36
      %s72 = ssub.s32 %s67, %s70
      %s73 = sor.u32 %s71, %s72
      %p74 = scmp.eq.s32.totalorder %s73, 0
      %s76 = sadd.s32 %s75, 1
      %s77 = scalar_select %p74, %s75, %s76
      %p80 = pneg %p74
      %p81 = scmp.eq.s32.totalorder %s17, 1
      %p82 = por %p80, %p81
      %p83 = scmp.ne.s32.totalorder %s75, %s78
      %p84 = scmp.eq.s32.totalorder %s17, 0
      %p85 = por %p83, %p84
      %p86 = scmp.ne.s32.totalorder %s75, %s78
      %p87 = scmp.eq.s32.totalorder %s22, 1
      %p88 = por %p86, %p87
      %p89 = scmp.ne.s32.totalorder %s78, %s79
      %p90 = scmp.eq.s32.totalorder %s22, 0
      %p91 = por %p89, %p90
      %p92 = scmp.ne.s32.totalorder %s78, %s79
      %p93 = scmp.eq.s32.totalorder %s23, 1
      %p94 = por %p92, %p93
      %p96 = scmp.ne.s32.totalorder %s79, %s95
      %p97 = scmp.eq.s32.totalorder %s23, 0
      %p98 = por %p96, %p97
      %s99 = ssub.s32 %s24, %s36
      %s100 = ssub.s32 %s25, %s32
      %s101 = sor.u32 %s99, %s100
      %p102 = scmp.eq.s32.totalorder %s101, 0
      %s104 = sadd.s32 %s103, 1
      %s105 = scalar_select %p102, %s103, %s104
      %p108 = pneg %p102
      %p109 = scmp.eq.s32.totalorder %s17, 1
      %p110 = por %p108, %p109
      %p111 = scmp.ne.s32.totalorder %s103, %s106
      %p112 = scmp.eq.s32.totalorder %s17, 0
      %p113 = por %p111, %p112
      %p114 = scmp.ne.s32.totalorder %s103, %s106
      %p115 = scmp.eq.s32.totalorder %s22, 1
      %p116 = por %p114, %p115
      %p117 = scmp.ne.s32.totalorder %s106, %s107
      %p118 = scmp.eq.s32.totalorder %s22, 0
      %p119 = por %p117, %p118
      %p120 = scmp.ne.s32.totalorder %s106, %s107
      %p121 = scmp.eq.s32.totalorder %s23, 1
      %p122 = por %p120, %p121
      %p124 = scmp.ne.s32.totalorder %s107, %s123
      %p125 = scmp.eq.s32.totalorder %s23, 0
      %p126 = por %p124, %p125
      %p127 = scmp.le.s32.totalorder 1, %s17
      %p128 = scmp.lt.s32.totalorder %s17, 3
      %p129 = pnand %p127, %p128
      %p130 = pneg %p129
      // Predicated region
      $region9: #{tpu_custom_call.1} parent=5 // pred_check
        _
      $region10: #{tpu_custom_call.1} parent=5 // pred_check_branch
        %132 = sbr.rel (%p129) target = $region12
      $region11: #{tpu_custom_call.1} parent=5 // pred_region
        %s133 = ssub.s32 %s17, 1
      $region12: #{tpu_custom_call.1} parent=5 // pred_fallthru
        _
      %p134 = scmp.lt.s32.totalorder %s17, 2
      // Predicated region
      $region13: #{tpu_custom_call.1} parent=5 // pred_check
        %p135 = pneg %p134
      $region14: #{tpu_custom_call.1} parent=5 // pred_check_branch
        %137 = sbr.rel (%p135) target = $region16
      $region15: #{tpu_custom_call.1} parent=5 // pred_region
        // Predicated region
        $region17: #{tpu_custom_call.1} parent=15 // pred_check
          %p138 = pneg %p51
        $region18: #{tpu_custom_call.1} parent=15 // pred_check_branch
          %140 = sbr.rel (%p138) target = $region20
        $region19: #{tpu_custom_call.1} parent=15 // pred_region
          %s141 = sand.u32 %s41, 1
          %s142 = scalar_lea.sflag [#allocation3], %s141
          %s143 = sand.u32 %s41, 1
          %s144 = smul.addr %s143, 48
          %s145 = scalar_lea.vmem [#allocation2], %s144
          %s146 = smul.u32 2, %s25
          %s148 = ssub.s32 768, 768
          %149 = vsyncadd %s142, %s148
          %s150 = smul.addr %s24, 6
          %s151 = sadd.s32 %s146, %s150
          %s152 = smul.addr %s151, 128
          %s153 = scalar_lea.hbm %s0, %s152
          %s154 = sshll.u32 %s145, 4
          %s155 = int_to_ptr.vmem [resolvable:$true] %s154
          %160 = dma.hbm_to_vmem [thread:$0]  %s153, 768, %s155, %s142, 128, 128, 8
        $region20: #{tpu_custom_call.1} parent=15 // pred_fallthru
          _
        // Predicated region
        $region21: #{tpu_custom_call.1} parent=15 // pred_check
          %p161 = pneg %p85
        $region22: #{tpu_custom_call.1} parent=15 // pred_check_branch
          %163 = sbr.rel (%p161) target = $region24
        $region23: #{tpu_custom_call.1} parent=15 // pred_region
          %s164 = sand.u32 %s75, 1
          %s165 = scalar_lea.sflag [#allocation6], %s164
          %s166 = sand.u32 %s75, 1
          %s167 = smul.addr %s166, 48
          %s168 = scalar_lea.vmem [#allocation5], %s167
          %s169 = ssub.s32 %s25, 1
          %p170 = scmp.gt.s32.totalorder %s169, 0
          %s171 = scalar_select %p170, %s169, 0
          %s172 = smul.u32 2, %s171
          %s174 = ssub.s32 768, 768
          %175 = vsyncadd %s165, %s174
          %s176 = smul.addr %s24, 6
          %s177 = sadd.s32 %s172, %s176
          %s178 = smul.addr %s177, 128
          %s179 = scalar_lea.hbm %s1, %s178
          %s180 = sshll.u32 %s168, 4
          %s181 = int_to_ptr.vmem [resolvable:$true] %s180
          %186 = dma.hbm_to_vmem [thread:$0]  %s179, 768, %s181, %s165, 128, 128, 8
        $region24: #{tpu_custom_call.1} parent=15 // pred_fallthru
          _
      $region16: #{tpu_custom_call.1} parent=5 // pred_fallthru
        _
      %p187 = scmp.le.s32.totalorder 1, %s17
      %p188 = scmp.lt.s32.totalorder %s17, 3
      %p189 = pnand %p187, %p188
      %p190 = pneg %p189
      // Predicated region
      $region25: #{tpu_custom_call.1} parent=5 // pred_check
        _
      $region26: #{tpu_custom_call.1} parent=5 // pred_check_branch
        %192 = sbr.rel (%p189) target = $region28
      $region27: #{tpu_custom_call.1} parent=5 // pred_region
        %s193 = ssub.s32 %s17, 1
        %s194 = sand.u32 %s44, 1
        %s195 = scalar_lea.sflag [#allocation3], %s194
        %s196 = sand.u32 %s44, 1
        %s197 = smul.addr %s196, 48
        %s198 = scalar_lea.vmem [#allocation2], %s197
        // Predicated region
        $region29: #{tpu_custom_call.1} parent=27 // pred_check
          %p199 = pneg %p57
        $region30: #{tpu_custom_call.1} parent=27 // pred_check_branch
          %201 = sbr.rel (%p199) target = $region32
        $region31: #{tpu_custom_call.1} parent=27 // pred_region
          %202 = dma.done %s195, 768
        $region32: #{tpu_custom_call.1} parent=27 // pred_fallthru
          _
        %s203 = sand.u32 %s78, 1
        %s204 = scalar_lea.sflag [#allocation6], %s203
        %s205 = sand.u32 %s78, 1
        %s206 = smul.addr %s205, 48
        %s207 = scalar_lea.vmem [#allocation5], %s206
        // Predicated region
        $region33: #{tpu_custom_call.1} parent=27 // pred_check
          %p208 = pneg %p91
        $region34: #{tpu_custom_call.1} parent=27 // pred_check_branch
          %210 = sbr.rel (%p208) target = $region36
        $region35: #{tpu_custom_call.1} parent=27 // pred_region
          %211 = dma.done %s204, 768
        $region36: #{tpu_custom_call.1} parent=27 // pred_fallthru
          _
        %s212 = sand.u32 %s44, 1
        %s213 = scalar_lea.sflag [#allocation3], %s212
        %s214 = sand.u32 %s44, 1
        %s215 = smul.addr %s214, 48
        %s216 = scalar_lea.vmem [#allocation2], %s215
        %p217 = pneg %p57
        %p218 = pneg %p54
        %s219 = sand.u32 %s78, 1
        %s220 = scalar_lea.sflag [#allocation6], %s219
        %s221 = sand.u32 %s78, 1
        %s222 = smul.addr %s221, 48
        %s223 = scalar_lea.vmem [#allocation5], %s222
        %p224 = pneg %p91
        %p225 = pneg %p88
        %p226 = pneg %p119
        %p227 = pneg %p116
        %s228 = sand.u32 %s106, 1
        %s229 = scalar_lea.sflag [#allocation4], %s228
        %s230 = sand.u32 %s106, 1
        %s231 = smul.addr %s230, 16
        %s232 = scalar_lea.vmem [#allocation7], %s231
        %s233 = smul.u32 2, %s27
        %s234 = ssub.s32 %s27, 1
        %p235 = scmp.gt.s32.totalorder %s234, 0
        %s236 = scalar_select %p235, %s234, 0
        %s237 = smul.u32 2, %s236
        %s238 = smul.u32 2, %s27
        %v239 = vld [vmem:[%s198] sm:$0xff]
        %v240 = vld [vmem:[%s198 + $0x8] sm:$0xff]
        %v241 = vld [vmem:[%s198 + $0x10] sm:$0xff]
        %v242 = vld [vmem:[%s198 + $0x18] sm:$0xff]
        %v243 = vld [vmem:[%s198 + $0x20] sm:$0xff]
        %v244 = vld [vmem:[%s198 + $0x28] sm:$0xff]
        %v245 = vmul.f32 %v239, 0.299
        %v246 = vmul.f32 %v240, 0.299
        %v247 = vmul.f32 %v241, 0.587
        %v248 = vmul.f32 %v242, 0.587
        %v249 = vadd.f32 %v245, %v247
        %v250 = vadd.f32 %v246, %v248
        %v251 = vmul.f32 %v243, 0.114
        %v252 = vmul.f32 %v244, 0.114
        %v253 = vadd.f32 %v249, %v251
        %v254 = vadd.f32 %v250, %v252
        %v255 = vld [vmem:[%s207 + $0xf] sm:$0x1]
        %v256 = vld [vmem:[%s207 + $0x1f] sm:$0x1]
        %v257 = vld [vmem:[%s207 + $0x2f] sm:$0x1]
        %v258 = vmul.f32 %v255, 0.299
        %v259 = vmul.f32 %v256, 0.587
        %v260 = vadd.f32 %v258, %v259
        %v261 = vmul.f32 %v257, 0.114
        %v262 = vadd.f32 %v260, %v261
        %vm263 = vcmask 1047680
        %264 = vrot.lane.b32.xlu0 %v253, 16
        %v265 = vpop.permute.xlu0 %264
        %v266 = vsel %vm263, %v265, %v253
        %267 = vrot.lane.b32.xlu0 %v254, 16
        %v268 = vpop.permute.xlu0 %267
        %v269 = vsel %vm263, %v268, %v254
        %270 = vrot.lane.b32.xlu0 %v266, 16
        %v271 = vpop.permute.xlu0 %270
        %272 = vrot.lane.b32.xlu0 %v269, 16
        %v273 = vpop.permute.xlu0 %272
        %v274 = vsel %vm263, %v271, %v253
        %v275 = vsel %vm263, %v273, %v254
        %278 = vrot.lane.b32.xlu0 %v274, 113
        %v279 = vpop.permute.xlu0 %278
        %280 = vrot.lane.b32.xlu0 %v275, 113
        %v281 = vpop.permute.xlu0 %280
        %v284 = vsub.f32 %v253, %v279
        %v285 = vsub.f32 %v254, %v281
        %v286 = vrot.slane %v253, 7
        %v287 = vrot.slane %v254, 7
        %v288 = vlaneseq
        %v289 = vshrl.u32 %v288, 7
        %vm290 = vcmp.lt.s32.totalorder %v289, 1
        %v291 = vsel %vm290, %v286, %v287
        %v292 = vsel %vm290, %v287, %v286
        %v293 = vsub.f32 %v253, %v292
        %v294 = vsub.f32 %v254, %v291
        %v295 = vlaneseq
        %v296 = vand.u32 %v295, 127
        %v297 = vadd.s32 %v289, 8
        %vm298 = vcmp.gt.s32.totalorder %v296, 0
        %v299 = vsel %vm298, %v284, 0.0
        %v300 = vsel %vm298, %v285, 0.0
        %vm301 = vcmp.eq.s32.totalorder %v289, 0
        %vm302 = vcmp.eq.s32.totalorder %v297, 0
        %v303 = vlaneseq
        %v304 = vshrl.u32 %v303, 7
        %v305 = vsub.s32 0, %v304
        %v306 = vrot.slane %v262, %v305
        %v307 = vsub.f32 %v253, %v306
        %v308 = vsub.f32 %v254, %v306
        %v309 = vsel %vm301, %v307, %v293
        %v310 = vsel %vm302, %v308, %v294
        %p311 = scmp.eq.s32.totalorder %s27, 0
        %s312 = scalar_select %p311, 1, 0
        %v313 = vstv %s312
        %vm314 = vcmp.eq.s32.totalorder %v313, 1
        %vm315 = vmand %vm301, %vm314
        %vm316 = vmand %vm302, %vm314
        %v317 = vsel %vm315, 0.0, %v309
        %v318 = vsel %vm316, 0.0, %v310
        %v319 = vmul.f32 %v299, %v299
        %v320 = vmul.f32 %v300, %v300
        %v321 = vmul.f32 %v317, %v317
        %v322 = vmul.f32 %v318, %v318
        %v323 = vadd.f32 %v319, %v321
        %v324 = vadd.f32 %v320, %v322
        %vm325 = vcmp.gt.f32.partialorder %v323, 0.01
        %vm326 = vcmp.gt.f32.partialorder %v324, 0.01
        %v327 = vsel %vm325, 1.0, 0.0
        %v328 = vsel %vm326, 1.0, 0.0
        %vm329 = vcmask 130048
        %330 = vst.msk [vmem:[%s232] sm:$0xff] %vm329, %v327
        %331 = vst.msk [vmem:[%s232 + $0x8] sm:$0xff] %vm329, %v328
        %s332 = sand.u32 %s106, 1
        %s333 = scalar_lea.sflag [#allocation4], %s332
        %s334 = sand.u32 %s106, 1
        %s335 = smul.addr %s334, 16
        %s336 = scalar_lea.vmem [#allocation7], %s335
        // Predicated region
        $region37: #{tpu_custom_call.1} parent=27 // pred_check
          %p337 = pneg %p116
        $region38: #{tpu_custom_call.1} parent=27 // pred_check_branch
          %339 = sbr.rel (%p337) target = $region40
        $region39: #{tpu_custom_call.1} parent=27 // pred_region
          %s340 = smul.u32 2, %s27
          %s342 = ssub.s32 256, 256
          %343 = vsyncadd %s333, %s342
          %s344 = smul.addr %s26, 2
          %s345 = sadd.s32 %s340, %s344
          %s346 = smul.addr %s345, 128
          %s347 = scalar_lea.hbm %s2, %s346
          %s348 = sshll.u32 %s336, 4
          %s349 = int_to_ptr.vmem [resolvable:$true] %s348
          %354 = dma.vmem_to_hbm [thread:$0]  %s349, 256, %s347, %s333, 128, 128, 8
        $region40: #{tpu_custom_call.1} parent=27 // pred_fallthru
          _
      $region28: #{tpu_custom_call.1} parent=5 // pred_fallthru
        _
      %p355 = scmp.le.s32.totalorder 2, %s17
      // Predicated region
      $region41: #{tpu_custom_call.1} parent=5 // pred_check
        %p356 = pneg %p355
      $region42: #{tpu_custom_call.1} parent=5 // pred_check_branch
        %358 = sbr.rel (%p356) target = $region44
      $region43: #{tpu_custom_call.1} parent=5 // pred_region
        %s359 = ssub.s32 %s17, 2
        // Predicated region
        $region45: #{tpu_custom_call.1} parent=43 // pred_check
          %p360 = pneg %p122
        $region46: #{tpu_custom_call.1} parent=43 // pred_check_branch
          %362 = sbr.rel (%p360) target = $region48
        $region47: #{tpu_custom_call.1} parent=43 // pred_region
          %s363 = sand.u32 %s107, 1
          %s364 = scalar_lea.sflag [#allocation4], %s363
          %s365 = sand.u32 %s107, 1
          %s366 = smul.addr %s365, 16
          %s367 = scalar_lea.vmem [#allocation7], %s366
          %368 = dma.done %s364, 256
        $region48: #{tpu_custom_call.1} parent=43 // pred_fallthru
          _
      $region44: #{tpu_custom_call.1} parent=5 // pred_fallthru
        _
    $region6: #{tpu_custom_call.1} parent=1 // loop_footer
      %s21 = sadd.s32 1, %s17
    $region7: #{tpu_custom_call.1} parent=1 // loop_footer_branch
      %16 = sbr.rel target = $region3
    $region8: #{tpu_custom_call.1} parent=1 // loop_exit
      _
    %369 = vsyncpa [#allocation3], 1
    %s370 = scalar_lea.sflag [#allocation3], 1
    %371 = vsyncpa %s370, 1
    %372 = vsyncpa [#allocation6], 1
    %s373 = scalar_lea.sflag [#allocation6], 1
    %374 = vsyncpa %s373, 1
    %375 = vsyncpa [#allocation4], 1
    %s376 = scalar_lea.sflag [#allocation4], 1
    %377 = vsyncpa %s376, 1

</llo_original>
